<compile_context>
chip_gen: v7x
topology: tpu7x:2x2x1
jax: 0.10.0
libtpu: 0.0.40
codegen_flags: <defaults>
</compile_context>

<pallas_src>
import functools

import jax
import jax.numpy as jnp
from jax.experimental import pallas as pl
from jax.experimental.pallas import tpu as pltpu


def _round_up(x, m):
    return ((x + m - 1) // m) * m


def _wrt_kernel(xa_ref, sqa_ref, ta_ref, sqr_ref, tr_ref,
                loss_ref, corr_ref, *, n_valid):
    # xa_ref : (Np, D) f32  full (padded) feature matrix (VMEM resident)
    # sqa_ref: (1, Np) f32  squared norms of all rows (column broadcast)
    # ta_ref : (1, Np) i32  labels of all rows (column broadcast)
    # sqr_ref: (T, 1)  f32  squared norms of the row tile
    # tr_ref : (T, 1)  i32  labels of the row tile
    # loss_ref, corr_ref : (T, 1) f32 per-row outputs
    xa = xa_ref[...]
    sqa = sqa_ref[...]
    ta = ta_ref[...]
    sqr = sqr_ref[...]
    tr = tr_ref[...]

    t_rows = tr.shape[0]
    n_pad = xa.shape[0]

    # Row tile sliced from the resident feature matrix (no extra DMA / buffer).
    row0 = pl.multiple_of(pl.program_id(0) * t_rows, t_rows)
    xr = xa_ref[pl.ds(row0, t_rows), :]                                  # (T, D)

    # Pairwise squared euclidean distance: |xi|^2 + |xj|^2 - 2 xi.xj  (MXU).
    g = jax.lax.dot_general(xr, xa, (((1,), (1,)), ((), ())),
                            preferred_element_type=jnp.float32)          # (T, Np)
    dist = jnp.sqrt(jnp.maximum(sqr + sqa - 2.0 * g, 1e-12))             # (T, Np)

    # Boolean positive / negative masks; padded columns masked out via iota.
    same = tr == ta                                                      # (T, Np)
    if n_valid == n_pad:
        is_pos = same
        is_neg = jnp.logical_not(same)
    else:
        col_ids = jax.lax.broadcasted_iota(jnp.int32, (t_rows, n_pad), 1)
        valid = col_ids < n_valid
        is_pos = jnp.logical_and(same, valid)
        is_neg = jnp.logical_and(jnp.logical_not(same), valid)

    # torch-style masked softmax weights, single fused exp:
    #   positives: exp(dist - max(dist * is_pos))   (max includes the 0s)
    #   negatives: exp(-dist - max(-dist * is_neg)); the max term is exactly 0
    #   under this masking, so it is omitted.  All exp args are <= 0 (stable).
    max_ap = jnp.max(jnp.where(is_pos, dist, 0.0), axis=1, keepdims=True)
    e = jnp.exp(jnp.where(is_pos, dist - max_ap, -dist))                 # (T, Np)
    e_ap = jnp.where(is_pos, e, 0.0)
    e_an = jnp.where(is_neg, e, 0.0)

    z_ap = jnp.sum(e_ap, axis=1, keepdims=True) + 1e-6
    z_an = jnp.sum(e_an, axis=1, keepdims=True) + 1e-6
    furthest_pos = jnp.sum(dist * e_ap, axis=1, keepdims=True) / z_ap    # (T, 1)
    closest_neg = jnp.sum(dist * e_an, axis=1, keepdims=True) / z_an     # (T, 1)

    # SoftMarginLoss(closest_neg - furthest_pos, +1) = softplus(fp - cn), stable.
    diff = furthest_pos - closest_neg
    loss_ref[...] = jnp.maximum(diff, 0.0) + jnp.log(1.0 + jnp.exp(-jnp.abs(diff)))
    corr_ref[...] = (closest_neg >= furthest_pos).astype(jnp.float32)


def triplet_loss_wrt(inputs, targets, normalize_feature=False, tile_rows=256):
    """inputs: (N, D) f32 features; targets: (N,) int labels -> (loss, correct)."""
    inputs = inputs.astype(jnp.float32)
    if normalize_feature:
        # normalize() from the reference: x / (||x||_2 + 1e-12); cheap elementwise,
        # done in plain JAX (fuses with the producer of `inputs`).
        inputs = inputs / (jnp.sqrt(jnp.sum(inputs * inputs, axis=-1, keepdims=True))
                           + 1e-12)

    n, d = inputs.shape

    # Tile sizing: sublane-aligned row tiles; split into >= 2 tiles when the
    # batch allows it so v7x's 2 TensorCores both get work on the parallel axis.
    n8 = _round_up(n, 8)
    num_tiles = max(1, -(-n8 // int(tile_rows)))
    if n8 > 8 and num_tiles < 2:
        num_tiles = 2
    tile_n = _round_up(-(-n8 // num_tiles), 8)
    n_pad = tile_n * num_tiles

    if n_pad != n:
        x_pad = jnp.zeros((n_pad, d), jnp.float32).at[:n].set(inputs)
        t_pad = jnp.full((n_pad,), -1, jnp.int32).at[:n].set(targets.astype(jnp.int32))
    else:
        x_pad = inputs
        t_pad = targets.astype(jnp.int32)

    sq = jnp.sum(x_pad * x_pad, axis=1)          # (Np,) squared norms
    sq_cols = sq.reshape(1, n_pad)               # column (j) broadcast, resident
    sq_rows = sq.reshape(n_pad, 1)               # row (i) tile input
    lab_cols = t_pad.reshape(1, n_pad)           # column labels, resident
    lab_rows = t_pad.reshape(n_pad, 1)           # row labels, per tile

    kernel = functools.partial(_wrt_kernel, n_valid=int(n))

    def _build(single_buffer):
        # Grid-invariant inputs (constant index maps) should keep a single VMEM
        # buffer; the default double buffer would be pure waste.
        const_kw = {"pipeline_mode": pl.Buffered(1)} if single_buffer else {}
        bufs = 1 if single_buffer else 2

        # Scoped-VMEM budget: resident features + (1, Np) rows + (T, 1) blocks
        # (lane/sublane padded) + ~10 live (T, Np) f32 temporaries, 25% headroom.
        vmem_need = (n_pad * d * 4 * bufs
                     + 2 * 8 * n_pad * 4 * bufs
                     + 4 * tile_n * 128 * 4 * 2
                     + 10 * tile_n * n_pad * 4)
        vmem_limit = int(min(max(vmem_need * 5 // 4, 16 << 20), 100 << 20))

        return pl.pallas_call(
            kernel,
            out_shape=(
                jax.ShapeDtypeStruct((n_pad, 1), jnp.float32),
                jax.ShapeDtypeStruct((n_pad, 1), jnp.float32),
            ),
            grid=(num_tiles,),
            in_specs=[
                pl.BlockSpec((n_pad, d), lambda i: (0, 0), **const_kw),   # features
                pl.BlockSpec((1, n_pad), lambda i: (0, 0), **const_kw),   # |x_j|^2
                pl.BlockSpec((1, n_pad), lambda i: (0, 0), **const_kw),   # labels j
                pl.BlockSpec((tile_n, 1), lambda i: (i, 0)),              # |x_i|^2
                pl.BlockSpec((tile_n, 1), lambda i: (i, 0)),              # labels i
            ],
            out_specs=(
                pl.BlockSpec((tile_n, 1), lambda i: (i, 0)),
                pl.BlockSpec((tile_n, 1), lambda i: (i, 0)),
            ),
            compiler_params=pltpu.CompilerParams(
                dimension_semantics=("parallel",),
                vmem_limit_bytes=vmem_limit),
            cost_estimate=pl.CostEstimate(
                flops=int(2 * n_pad * n_pad * d + 25 * n_pad * n_pad),
                transcendentals=int(2 * n_pad * n_pad),        # sqrt + fused exp
                bytes_accessed=int(4 * (n_pad * d + 6 * n_pad))),
        )

    args = (x_pad, sq_cols, lab_cols, sq_rows, lab_rows)
    try:
        per_row_loss, per_row_corr = _build(True)(*args)
    except Exception:
        # Fallback for jax versions without BlockSpec.pipeline_mode / Buffered(1):
        # identical kernel, default (double) buffering on the constant inputs.
        per_row_loss, per_row_corr = _build(False)(*args)

    # Final reductions over the true (unpadded) batch, with the true denominator.
    loss = jnp.mean(per_row_loss[:n, 0])
    correct = jnp.sum(per_row_corr[:n, 0]).astype(jnp.int32)
    return loss, correct


def _reference(inputs, targets):
    """Pure-JAX mirror of the PyTorch TripletLoss_WRT forward."""
    inputs = inputs.astype(jnp.float32)
    sq = jnp.sum(inputs * inputs, axis=1, keepdims=True)
    d2 = sq + sq.T - 2.0 * jnp.dot(inputs, inputs.T,
                                   precision=jax.lax.Precision.HIGHEST)
    dist = jnp.sqrt(jnp.clip(d2, 1e-12, None))
    is_pos = (targets[:, None] == targets[None, :]).astype(jnp.float32)
    is_neg = 1.0 - is_pos
    dist_ap = dist * is_pos
    dist_an = dist * is_neg

    def softmax_weights(dd, mask):
        max_v = jnp.max(dd * mask, axis=1, keepdims=True)
        diff = dd - max_v
        z = jnp.sum(jnp.exp(diff) * mask, axis=1, keepdims=True) + 1e-6
        return jnp.exp(diff) * mask / z

    w_ap = softmax_weights(dist_ap, is_pos)
    w_an = softmax_weights(-dist_an, is_neg)
    fp = jnp.sum(dist_ap * w_ap, axis=1)
    cn = jnp.sum(dist_an * w_an, axis=1)
    diff = fp - cn
    loss = jnp.mean(jnp.maximum(diff, 0.0) + jnp.log1p(jnp.exp(-jnp.abs(diff))))
    correct = jnp.sum(cn >= fp).astype(jnp.int32)
    return loss, correct


if __name__ == "__main__":
    batch, feat = 8, 32
    key = jax.random.PRNGKey(0)
    k_x, k_t = jax.random.split(key)
    inputs = jax.random.normal(k_x, (batch, feat), dtype=jnp.float32)
    targets = jax.random.randint(k_t, (batch,), 0, 4, dtype=jnp.int32)

    loss, correct = triplet_loss_wrt(inputs, targets)
    loss = jax.block_until_ready(loss)
    correct = jax.block_until_ready(correct)

    ref_loss, ref_correct = _reference(inputs, targets)
    assert jnp.allclose(loss, ref_loss, rtol=1e-4, atol=1e-4), (loss, ref_loss)
    assert int(correct) == int(ref_correct), (int(correct), int(ref_correct))

    print("KERNEL_OK")
</pallas_src>

<mosaic_0001>
module attributes {stable_mosaic.version = 11 : i64} {
  func.func @_wrt_kernel(%arg0: i32, %arg1: memref<8x32xf32, #tpu.memory_space<vmem>>, %arg2: memref<1x8xf32, #tpu.memory_space<vmem>>, %arg3: memref<1x8xi32, #tpu.memory_space<vmem>>, %arg4: memref<8x1xf32, #tpu.memory_space<vmem>>, %arg5: memref<8x1xi32, #tpu.memory_space<vmem>>, %arg6: memref<8x1xf32, #tpu.memory_space<vmem>>, %arg7: memref<8x1xf32, #tpu.memory_space<vmem>>) attributes {dimension_semantics = [#tpu.dimension_semantics<parallel>], iteration_bounds = array<i64: 1>, scalar_prefetch = 0 : i64, scratch_operands = 0 : i64, tpu.core_type = #tpu.core_type<tc>, window_params = [{pipeline_mode = #tpu.pipeline_mode<synchronous>, transform_indices = @transform_0, window_bounds = array<i64: 8, 32>}, {pipeline_mode = #tpu.pipeline_mode<synchronous>, transform_indices = @transform_1, window_bounds = array<i64: 1, 8>}, {pipeline_mode = #tpu.pipeline_mode<synchronous>, transform_indices = @transform_2, window_bounds = array<i64: 1, 8>}, {transform_indices = @transform_3, window_bounds = array<i64: 8, 1>}, {transform_indices = @transform_4, window_bounds = array<i64: 8, 1>}, {transform_indices = @transform_5, window_bounds = array<i64: 8, 1>}, {transform_indices = @transform_6, window_bounds = array<i64: 8, 1>}]} {
    %c0 = arith.constant 0 : index
    %c0_0 = arith.constant 0 : index
    %0 = vector.load %arg1[%c0, %c0_0] : memref<8x32xf32, #tpu.memory_space<vmem>>, vector<8x32xf32>
    %c0_1 = arith.constant 0 : index
    %c0_2 = arith.constant 0 : index
    %1 = vector.load %arg2[%c0_1, %c0_2] : memref<1x8xf32, #tpu.memory_space<vmem>>, vector<1x8xf32>
    %c0_3 = arith.constant 0 : index
    %c0_4 = arith.constant 0 : index
    %2 = vector.load %arg3[%c0_3, %c0_4] : memref<1x8xi32, #tpu.memory_space<vmem>>, vector<1x8xi32>
    %c0_5 = arith.constant 0 : index
    %c0_6 = arith.constant 0 : index
    %3 = vector.load %arg4[%c0_5, %c0_6] : memref<8x1xf32, #tpu.memory_space<vmem>>, vector<8x1xf32>
    %c0_7 = arith.constant 0 : index
    %c0_8 = arith.constant 0 : index
    %4 = vector.load %arg5[%c0_7, %c0_8] : memref<8x1xi32, #tpu.memory_space<vmem>>, vector<8x1xi32>
    %c8_i32 = arith.constant 8 : i32
    %5 = arith.muli %arg0, %c8_i32 : i32
    %6 = tpu.assume_multiple %5, 8 : i32
    %7 = arith.index_cast %6 : i32 to index
    %c0_9 = arith.constant 0 : index
    %8 = vector.load %arg1[%7, %c0_9] : memref<8x32xf32, #tpu.memory_space<vmem>>, vector<8x32xf32>
    %cst = arith.constant dense<0.000000e+00> : vector<8x8xf32>
    %9 = tpu.matmul %8, %0, %cst {dimension_numbers = #tpu.dot_dimension_numbers<[1], [1], [0], [0], [0, 0, 1, 0], [], []>} : vector<8x32xf32>, vector<8x32xf32>, vector<8x8xf32> -> vector<8x8xf32>
    %10 = vector.broadcast %3 : vector<8x1xf32> to vector<8x8xf32>
    %11 = vector.broadcast %1 : vector<1x8xf32> to vector<8x8xf32>
    %12 = arith.addf %10, %11 : vector<8x8xf32>
    %cst_10 = arith.constant 2.000000e+00 : f32
    %13 = vector.broadcast %cst_10 : f32 to vector<8x8xf32>
    %14 = arith.mulf %13, %9 : vector<8x8xf32>
    %15 = arith.subf %12, %14 : vector<8x8xf32>
    %cst_11 = arith.constant 9.99999996E-13 : f32
    %16 = vector.broadcast %cst_11 : f32 to vector<8x8xf32>
    %17 = arith.maximumf %15, %16 : vector<8x8xf32>
    %18 = math.sqrt %17 : vector<8x8xf32>
    %19 = vector.broadcast %4 : vector<8x1xi32> to vector<8x8xi32>
    %20 = vector.broadcast %2 : vector<1x8xi32> to vector<8x8xi32>
    %21 = arith.cmpi eq, %19, %20 : vector<8x8xi32>
    %cst_12 = arith.constant dense<true> : vector<8x8xi1>
    %22 = arith.xori %21, %cst_12 : vector<8x8xi1>
    %cst_13 = arith.constant 0.000000e+00 : f32
    %23 = vector.broadcast %cst_13 : f32 to vector<8x8xf32>
    %24 = arith.select %21, %18, %23 : vector<8x8xi1>, vector<8x8xf32>
    %cst_14 = arith.constant dense<0xFF800000> : vector<8xf32>
    %25 = vector.multi_reduction <maximumf>, %24, %cst_14 [1] : vector<8x8xf32> to vector<8xf32>
    %26 = vector.shape_cast %25 : vector<8xf32> to vector<8x1xf32>
    %27 = vector.broadcast %26 : vector<8x1xf32> to vector<8x8xf32>
    %28 = arith.subf %18, %27 : vector<8x8xf32>
    %cst_15 = arith.constant 0.000000e+00 : f32
    %29 = vector.broadcast %cst_15 : f32 to vector<8x8xf32>
    %30 = arith.subf %29, %18 : vector<8x8xf32>
    %31 = arith.select %21, %28, %30 : vector<8x8xi1>, vector<8x8xf32>
    %32 = math.exp %31 : vector<8x8xf32>
    %cst_16 = arith.constant 0.000000e+00 : f32
    %33 = vector.broadcast %cst_16 : f32 to vector<8x8xf32>
    %34 = arith.select %21, %32, %33 : vector<8x8xi1>, vector<8x8xf32>
    %cst_17 = arith.constant 0.000000e+00 : f32
    %35 = vector.broadcast %cst_17 : f32 to vector<8x8xf32>
    %36 = arith.select %22, %32, %35 : vector<8x8xi1>, vector<8x8xf32>
    %cst_18 = arith.constant dense<0.000000e+00> : vector<8xf32>
    %37 = vector.multi_reduction <add>, %34, %cst_18 [1] : vector<8x8xf32> to vector<8xf32>
    %38 = vector.shape_cast %37 : vector<8xf32> to vector<8x1xf32>
    %cst_19 = arith.constant 9.99999997E-7 : f32
    %39 = vector.broadcast %cst_19 : f32 to vector<8x1xf32>
    %40 = arith.addf %38, %39 : vector<8x1xf32>
    %cst_20 = arith.constant dense<0.000000e+00> : vector<8xf32>
    %41 = vector.multi_reduction <add>, %36, %cst_20 [1] : vector<8x8xf32> to vector<8xf32>
    %42 = vector.shape_cast %41 : vector<8xf32> to vector<8x1xf32>
    %cst_21 = arith.constant 9.99999997E-7 : f32
    %43 = vector.broadcast %cst_21 : f32 to vector<8x1xf32>
    %44 = arith.addf %42, %43 : vector<8x1xf32>
    %45 = arith.mulf %18, %34 : vector<8x8xf32>
    %cst_22 = arith.constant dense<0.000000e+00> : vector<8xf32>
    %46 = vector.multi_reduction <add>, %45, %cst_22 [1] : vector<8x8xf32> to vector<8xf32>
    %47 = vector.shape_cast %46 : vector<8xf32> to vector<8x1xf32>
    %48 = arith.divf %47, %40 : vector<8x1xf32>
    %49 = arith.mulf %18, %36 : vector<8x8xf32>
    %cst_23 = arith.constant dense<0.000000e+00> : vector<8xf32>
    %50 = vector.multi_reduction <add>, %49, %cst_23 [1] : vector<8x8xf32> to vector<8xf32>
    %51 = vector.shape_cast %50 : vector<8xf32> to vector<8x1xf32>
    %52 = arith.divf %51, %44 : vector<8x1xf32>
    %53 = arith.subf %48, %52 : vector<8x1xf32>
    %cst_24 = arith.constant 0.000000e+00 : f32
    %54 = vector.broadcast %cst_24 : f32 to vector<8x1xf32>
    %55 = arith.maximumf %53, %54 : vector<8x1xf32>
    %56 = math.absf %53 : vector<8x1xf32>
    %cst_25 = arith.constant 0.000000e+00 : f32
    %57 = vector.broadcast %cst_25 : f32 to vector<8x1xf32>
    %58 = arith.subf %57, %56 : vector<8x1xf32>
    %59 = math.exp %58 : vector<8x1xf32>
    %cst_26 = arith.constant 1.000000e+00 : f32
    %60 = vector.broadcast %cst_26 : f32 to vector<8x1xf32>
    %61 = arith.addf %60, %59 : vector<8x1xf32>
    %62 = math.log %61 : vector<8x1xf32>
    %63 = arith.addf %55, %62 : vector<8x1xf32>
    %c0_27 = arith.constant 0 : index
    %c0_28 = arith.constant 0 : index
    %64 = vector.load %arg6[%c0_27, %c0_28] : memref<8x1xf32, #tpu.memory_space<vmem>>, vector<8x1xf32>
    tpu.vector_store %arg6[%c0_27, %c0_28], %63 {strides = array<i32>} : memref<8x1xf32, #tpu.memory_space<vmem>>, vector<8x1xf32>,
    %65 = arith.cmpf oge, %52, %48 : vector<8x1xf32>
    %66 = arith.extui %65 : vector<8x1xi1> to vector<8x1xi32>
    %67 = arith.sitofp %66 : vector<8x1xi32> to vector<8x1xf32>
    %c0_29 = arith.constant 0 : index
    %c0_30 = arith.constant 0 : index
    %68 = vector.load %arg7[%c0_29, %c0_30] : memref<8x1xf32, #tpu.memory_space<vmem>>, vector<8x1xf32>
    tpu.vector_store %arg7[%c0_29, %c0_30], %67 {strides = array<i32>} : memref<8x1xf32, #tpu.memory_space<vmem>>, vector<8x1xf32>,
    return
  }
  func.func @transform_0(%arg0: i32) -> (i32, i32) {
    %c0_i32 = arith.constant 0 : i32
    %c0_i32_0 = arith.constant 0 : i32
    %c0_i32_1 = arith.constant 0 : i32
    return %c0_i32, %c0_i32_0 : i32, i32
  }
  func.func @transform_1(%arg0: i32) -> (i32, i32) {
    %c0_i32 = arith.constant 0 : i32
    %c0_i32_0 = arith.constant 0 : i32
    %c0_i32_1 = arith.constant 0 : i32
    return %c0_i32, %c0_i32_0 : i32, i32
  }
  func.func @transform_2(%arg0: i32) -> (i32, i32) {
    %c0_i32 = arith.constant 0 : i32
    %c0_i32_0 = arith.constant 0 : i32
    %c0_i32_1 = arith.constant 0 : i32
    return %c0_i32, %c0_i32_0 : i32, i32
  }
  func.func @transform_3(%arg0: i32) -> (i32, i32) {
    %c0_i32 = arith.constant 0 : i32
    %c0_i32_0 = arith.constant 0 : i32
    return %arg0, %c0_i32 : i32, i32
  }
  func.func @transform_4(%arg0: i32) -> (i32, i32) {
    %c0_i32 = arith.constant 0 : i32
    %c0_i32_0 = arith.constant 0 : i32
    return %arg0, %c0_i32 : i32, i32
  }
  func.func @transform_5(%arg0: i32) -> (i32, i32) {
    %c0_i32 = arith.constant 0 : i32
    %c0_i32_0 = arith.constant 0 : i32
    return %arg0, %c0_i32 : i32, i32
  }
  func.func @transform_6(%arg0: i32) -> (i32, i32) {
    %c0_i32 = arith.constant 0 : i32
    %c0_i32_0 = arith.constant 0 : i32
    return %arg0, %c0_i32 : i32, i32
  }
}

module attributes {stable_mosaic.version = 11 : i64} {
  func.func @_wrt_kernel(%arg0: i32, %arg1: memref<8x32xf32, #tpu.memory_space<vmem>>, %arg2: memref<1x8xf32, #tpu.memory_space<vmem>>, %arg3: memref<1x8xi32, #tpu.memory_space<vmem>>, %arg4: memref<8x1xf32, #tpu.memory_space<vmem>>, %arg5: memref<8x1xi32, #tpu.memory_space<vmem>>, %arg6: memref<8x1xf32, #tpu.memory_space<vmem>>, %arg7: memref<8x1xf32, #tpu.memory_space<vmem>>) attributes {dimension_semantics = [#tpu.dimension_semantics<parallel>], iteration_bounds = array<i64: 1>, scalar_prefetch = 0 : i64, scratch_operands = 0 : i64, tpu.core_type = #tpu.core_type<tc>, window_params = [{pipeline_mode = #tpu.pipeline_mode<synchronous>, transform_indices = @transform_0, window_bounds = array<i64: 8, 32>}, {pipeline_mode = #tpu.pipeline_mode<synchronous>, transform_indices = @transform_1, window_bounds = array<i64: 1, 8>}, {pipeline_mode = #tpu.pipeline_mode<synchronous>, transform_indices = @transform_2, window_bounds = array<i64: 1, 8>}, {transform_indices = @transform_3, window_bounds = array<i64: 8, 1>}, {transform_indices = @transform_4, window_bounds = array<i64: 8, 1>}, {transform_indices = @transform_5, window_bounds = array<i64: 8, 1>}, {transform_indices = @transform_6, window_bounds = array<i64: 8, 1>}]} {
    %c0 = arith.constant 0 : index
    %c0_0 = arith.constant 0 : index
    %0 = vector.load %arg1[%c0, %c0_0] : memref<8x32xf32, #tpu.memory_space<vmem>>, vector<8x32xf32>
    %c0_1 = arith.constant 0 : index
    %c0_2 = arith.constant 0 : index
    %1 = vector.load %arg2[%c0_1, %c0_2] : memref<1x8xf32, #tpu.memory_space<vmem>>, vector<1x8xf32>
    %c0_3 = arith.constant 0 : index
    %c0_4 = arith.constant 0 : index
    %2 = vector.load %arg3[%c0_3, %c0_4] : memref<1x8xi32, #tpu.memory_space<vmem>>, vector<1x8xi32>
    %c0_5 = arith.constant 0 : index
    %c0_6 = arith.constant 0 : index
    %3 = vector.load %arg4[%c0_5, %c0_6] : memref<8x1xf32, #tpu.memory_space<vmem>>, vector<8x1xf32>
    %c0_7 = arith.constant 0 : index
    %c0_8 = arith.constant 0 : index
    %4 = vector.load %arg5[%c0_7, %c0_8] : memref<8x1xi32, #tpu.memory_space<vmem>>, vector<8x1xi32>
    %c8_i32 = arith.constant 8 : i32
    %5 = arith.muli %arg0, %c8_i32 : i32
    %6 = tpu.assume_multiple %5, 8 : i32
    %7 = arith.index_cast %6 : i32 to index
    %c0_9 = arith.constant 0 : index
    %8 = vector.load %arg1[%7, %c0_9] : memref<8x32xf32, #tpu.memory_space<vmem>>, vector<8x32xf32>
    %cst = arith.constant dense<0.000000e+00> : vector<8x8xf32>
    %9 = tpu.matmul %8, %0, %cst {dimension_numbers = #tpu.dot_dimension_numbers<[1], [1], [0], [0], [0, 0, 1, 0], [], []>} : vector<8x32xf32>, vector<8x32xf32>, vector<8x8xf32> -> vector<8x8xf32>
    %10 = vector.broadcast %3 : vector<8x1xf32> to vector<8x8xf32>
    %11 = vector.broadcast %1 : vector<1x8xf32> to vector<8x8xf32>
    %12 = arith.addf %10, %11 : vector<8x8xf32>
    %cst_10 = arith.constant 2.000000e+00 : f32
    %13 = vector.broadcast %cst_10 : f32 to vector<8x8xf32>
    %14 = arith.mulf %13, %9 : vector<8x8xf32>
    %15 = arith.subf %12, %14 : vector<8x8xf32>
    %cst_11 = arith.constant 9.99999996E-13 : f32
    %16 = vector.broadcast %cst_11 : f32 to vector<8x8xf32>
    %17 = arith.maximumf %15, %16 : vector<8x8xf32>
    %18 = math.sqrt %17 : vector<8x8xf32>
    %19 = vector.broadcast %4 : vector<8x1xi32> to vector<8x8xi32>
    %20 = vector.broadcast %2 : vector<1x8xi32> to vector<8x8xi32>
    %21 = arith.cmpi eq, %19, %20 : vector<8x8xi32>
    %cst_12 = arith.constant dense<true> : vector<8x8xi1>
    %22 = arith.xori %21, %cst_12 : vector<8x8xi1>
    %cst_13 = arith.constant 0.000000e+00 : f32
    %23 = vector.broadcast %cst_13 : f32 to vector<8x8xf32>
    %24 = arith.select %21, %18, %23 : vector<8x8xi1>, vector<8x8xf32>
    %cst_14 = arith.constant dense<0xFF800000> : vector<8xf32>
    %25 = vector.multi_reduction <maximumf>, %24, %cst_14 [1] : vector<8x8xf32> to vector<8xf32>
    %26 = vector.shape_cast %25 : vector<8xf32> to vector<8x1xf32>
    %27 = vector.broadcast %26 : vector<8x1xf32> to vector<8x8xf32>
    %28 = arith.subf %18, %27 : vector<8x8xf32>
    %cst_15 = arith.constant 0.000000e+00 : f32
    %29 = vector.broadcast %cst_15 : f32 to vector<8x8xf32>
    %30 = arith.subf %29, %18 : vector<8x8xf32>
    %31 = arith.select %21, %28, %30 : vector<8x8xi1>, vector<8x8xf32>
    %32 = math.exp %31 : vector<8x8xf32>
    %cst_16 = arith.constant 0.000000e+00 : f32
    %33 = vector.broadcast %cst_16 : f32 to vector<8x8xf32>
    %34 = arith.select %21, %32, %33 : vector<8x8xi1>, vector<8x8xf32>
    %cst_17 = arith.constant 0.000000e+00 : f32
    %35 = vector.broadcast %cst_17 : f32 to vector<8x8xf32>
    %36 = arith.select %22, %32, %35 : vector<8x8xi1>, vector<8x8xf32>
    %cst_18 = arith.constant dense<0.000000e+00> : vector<8xf32>
    %37 = vector.multi_reduction <add>, %34, %cst_18 [1] : vector<8x8xf32> to vector<8xf32>
    %38 = vector.shape_cast %37 : vector<8xf32> to vector<8x1xf32>
    %cst_19 = arith.constant 9.99999997E-7 : f32
    %39 = vector.broadcast %cst_19 : f32 to vector<8x1xf32>
    %40 = arith.addf %38, %39 : vector<8x1xf32>
    %cst_20 = arith.constant dense<0.000000e+00> : vector<8xf32>
    %41 = vector.multi_reduction <add>, %36, %cst_20 [1] : vector<8x8xf32> to vector<8xf32>
    %42 = vector.shape_cast %41 : vector<8xf32> to vector<8x1xf32>
    %cst_21 = arith.constant 9.99999997E-7 : f32
    %43 = vector.broadcast %cst_21 : f32 to vector<8x1xf32>
    %44 = arith.addf %42, %43 : vector<8x1xf32>
    %45 = arith.mulf %18, %34 : vector<8x8xf32>
    %cst_22 = arith.constant dense<0.000000e+00> : vector<8xf32>
    %46 = vector.multi_reduction <add>, %45, %cst_22 [1] : vector<8x8xf32> to vector<8xf32>
    %47 = vector.shape_cast %46 : vector<8xf32> to vector<8x1xf32>
    %48 = arith.divf %47, %40 : vector<8x1xf32>
    %49 = arith.mulf %18, %36 : vector<8x8xf32>
    %cst_23 = arith.constant dense<0.000000e+00> : vector<8xf32>
    %50 = vector.multi_reduction <add>, %49, %cst_23 [1] : vector<8x8xf32> to vector<8xf32>
    %51 = vector.shape_cast %50 : vector<8xf32> to vector<8x1xf32>
    %52 = arith.divf %51, %44 : vector<8x1xf32>
    %53 = arith.subf %48, %52 : vector<8x1xf32>
    %cst_24 = arith.constant 0.000000e+00 : f32
    %54 = vector.broadcast %cst_24 : f32 to vector<8x1xf32>
    %55 = arith.maximumf %53, %54 : vector<8x1xf32>
    %56 = math.absf %53 : vector<8x1xf32>
    %cst_25 = arith.constant 0.000000e+00 : f32
    %57 = vector.broadcast %cst_25 : f32 to vector<8x1xf32>
    %58 = arith.subf %57, %56 : vector<8x1xf32>
    %59 = math.exp %58 : vector<8x1xf32>
    %cst_26 = arith.constant 1.000000e+00 : f32
    %60 = vector.broadcast %cst_26 : f32 to vector<8x1xf32>
    %61 = arith.addf %60, %59 : vector<8x1xf32>
    %62 = math.log %61 : vector<8x1xf32>
    %63 = arith.addf %55, %62 : vector<8x1xf32>
    %c0_27 = arith.constant 0 : index
    %c0_28 = arith.constant 0 : index
    %64 = vector.load %arg6[%c0_27, %c0_28] : memref<8x1xf32, #tpu.memory_space<vmem>>, vector<8x1xf32>
    tpu.vector_store %arg6[%c0_27, %c0_28], %63 {strides = array<i32>} : memref<8x1xf32, #tpu.memory_space<vmem>>, vector<8x1xf32>,
    %65 = arith.cmpf oge, %52, %48 : vector<8x1xf32>
    %66 = arith.extui %65 : vector<8x1xi1> to vector<8x1xi32>
    %67 = arith.sitofp %66 : vector<8x1xi32> to vector<8x1xf32>
    %c0_29 = arith.constant 0 : index
    %c0_30 = arith.constant 0 : index
    %68 = vector.load %arg7[%c0_29, %c0_30] : memref<8x1xf32, #tpu.memory_space<vmem>>, vector<8x1xf32>
    tpu.vector_store %arg7[%c0_29, %c0_30], %67 {strides = array<i32>} : memref<8x1xf32, #tpu.memory_space<vmem>>, vector<8x1xf32>,
    return
  }
  func.func @transform_0(%arg0: i32) -> (i32, i32) {
    %c0_i32 = arith.constant 0 : i32
    %c0_i32_0 = arith.constant 0 : i32
    %c0_i32_1 = arith.constant 0 : i32
    return %c0_i32, %c0_i32_0 : i32, i32
  }
  func.func @transform_1(%arg0: i32) -> (i32, i32) {
    %c0_i32 = arith.constant 0 : i32
    %c0_i32_0 = arith.constant 0 : i32
    %c0_i32_1 = arith.constant 0 : i32
    return %c0_i32, %c0_i32_0 : i32, i32
  }
  func.func @transform_2(%arg0: i32) -> (i32, i32) {
    %c0_i32 = arith.constant 0 : i32
    %c0_i32_0 = arith.constant 0 : i32
    %c0_i32_1 = arith.constant 0 : i32
    return %c0_i32, %c0_i32_0 : i32, i32
  }
  func.func @transform_3(%arg0: i32) -> (i32, i32) {
    %c0_i32 = arith.constant 0 : i32
    %c0_i32_0 = arith.constant 0 : i32
    return %arg0, %c0_i32 : i32, i32
  }
  func.func @transform_4(%arg0: i32) -> (i32, i32) {
    %c0_i32 = arith.constant 0 : i32
    %c0_i32_0 = arith.constant 0 : i32
    return %arg0, %c0_i32 : i32, i32
  }
  func.func @transform_5(%arg0: i32) -> (i32, i32) {
    %c0_i32 = arith.constant 0 : i32
    %c0_i32_0 = arith.constant 0 : i32
    return %arg0, %c0_i32 : i32, i32
  }
  func.func @transform_6(%arg0: i32) -> (i32, i32) {
    %c0_i32 = arith.constant 0 : i32
    %c0_i32_0 = arith.constant 0 : i32
    return %arg0, %c0_i32 : i32, i32
  }
}

</mosaic_0001>

<llo_original>
// kernel: tpu_custom_call.1
$region0: #{tpu_custom_call.1}
  #allocation0 [shape = 'u32[]', space=smem, size = 0x4, offset = 0x4, fixed_abs, tag = 'smem constant byte address 0x4 - core index']
  #allocation1 [shape = 'u32[144,128]{1,0:T(1,128)}', space=vmem, size = 0x12000, scoped, tag = 'internal scratch']
  %s0 = inlined_call_operand.vmem [shape: f32[8,32], index: 0, kind: input, shape index: {}]
  %s1 = inlined_call_operand.vmem [shape: f32[1,8], index: 1, kind: input, shape index: {}]
  %s2 = inlined_call_operand.vmem [shape: s32[1,8], index: 2, kind: input, shape index: {}]
  %s3 = inlined_call_operand.vmem [shape: f32[8,1], index: 3, kind: input, shape index: {}]
  %s4 = inlined_call_operand.vmem [shape: s32[8,1], index: 4, kind: input, shape index: {}]
  %s5 = inlined_call_operand.vmem [shape: f32[8,1], index: 5, kind: output, shape index: {0}]
  %s6 = inlined_call_operand.vmem [shape: f32[8,1], index: 6, kind: output, shape index: {1}]
  %7 = xla_tuple %s5, %s6
  %s8 = sld [smem:[#allocation0]]
  $region38: #{tpu_custom_call.1} parent=0
    _
  %s10 = ssub.s32 1, %s8
  %s11 = scalar_select 0, %s10, %s8
  // Predicated region
  $region2: #{tpu_custom_call.1} parent=0 // pred_check
    _
  $region3: #{tpu_custom_call.1} parent=0 // pred_check_branch
    %13 = sbr.rel (0) target = $region5
  $region4: #{tpu_custom_call.1} parent=0 // pred_region
    _
  $region5: #{tpu_custom_call.1} parent=0 // pred_fallthru
    _
  // Predicated region
  $region6: #{tpu_custom_call.1} parent=0 // pred_check
    _
  $region7: #{tpu_custom_call.1} parent=0 // pred_check_branch
    %15 = sbr.rel (0) target = $region9
  $region8: #{tpu_custom_call.1} parent=0 // pred_region
    _
  $region9: #{tpu_custom_call.1} parent=0 // pred_fallthru
    _
  // Predicated region
  $region10: #{tpu_custom_call.1} parent=0 // pred_check
    _
  $region11: #{tpu_custom_call.1} parent=0 // pred_check_branch
    %17 = sbr.rel (0) target = $region13
  $region12: #{tpu_custom_call.1} parent=0 // pred_region
    _
  $region13: #{tpu_custom_call.1} parent=0 // pred_fallthru
    _
  // Predicated region
  $region14: #{tpu_custom_call.1} parent=0 // pred_check
    _
  $region15: #{tpu_custom_call.1} parent=0 // pred_check_branch
    %19 = sbr.rel (0) target = $region17
  $region16: #{tpu_custom_call.1} parent=0 // pred_region
    _
  $region17: #{tpu_custom_call.1} parent=0 // pred_fallthru
    _
  // Predicated region
  $region18: #{tpu_custom_call.1} parent=0 // pred_check
    _
  $region19: #{tpu_custom_call.1} parent=0 // pred_check_branch
    %21 = sbr.rel (0) target = $region21
  $region20: #{tpu_custom_call.1} parent=0 // pred_region
    _
  $region21: #{tpu_custom_call.1} parent=0 // pred_fallthru
    _
  %v22 = vld [vmem:[%s0] sm:$0xff]
  %v23 = vld [vmem:[%s1] sm:$0x1]
  %v24 = vld [vmem:[%s2] sm:$0x1]
  %v25 = vld [vmem:[%s3] sm:$0xff]
  %v26 = vld [vmem:[%s4] sm:$0xff]
  %s27 = smul.u32 0, 8
  %s28 = scalar_lea.vmem %s0, %s27
  %v29 = vld [vmem:[%s28] sm:$0xff]
  %vm30 = vcmask 261120
  %v32 = vsel %vm30, %v29, 0
  %v35 = vsel %vm30, %v22, 0
  %37 = vmatprep.subr.mxu0 0.0
  %38 = vmatpush1.xpose.msra.mxu0 %v35
  %39 = vmatprep.subr.mxu0 0.0
  %40 = vmatpush1.xpose.msra.mxu0 0.0
  %41 = vmatprep.subr.mxu0 0.0
  %42 = vmatpush1.xpose.msra.mxu0 0.0
  %43 = vmatprep.subr.mxu0 0.0
  %44 = vmatpush1.xpose.msra.mxu0 0.0
  %45 = vmatprep.subr.mxu0 0.0
  %46 = vmatpush1.xpose.msra.mxu0 0.0
  %47 = vmatprep.subr.mxu0 0.0
  %48 = vmatpush1.xpose.msra.mxu0 0.0
  %49 = vmatprep.subr.mxu0 0.0
  %50 = vmatpush1.xpose.msra.mxu0 0.0
  %51 = vmatprep.subr.mxu0 0.0
  %52 = vmatpush1.xpose.msra.mxu0 0.0
  %53 = vmatprep.subr.mxu0 0.0
  %54 = vmatpush1.xpose.msra.mxu0 0.0
  %55 = vmatprep.subr.mxu0 0.0
  %56 = vmatpush1.xpose.msra.mxu0 0.0
  %57 = vmatprep.subr.mxu0 0.0
  %58 = vmatpush1.xpose.msra.mxu0 0.0
  %59 = vmatprep.subr.mxu0 0.0
  %60 = vmatpush1.xpose.msra.mxu0 0.0
  %61 = vmatprep.subr.mxu0 0.0
  %62 = vmatpush1.xpose.msra.mxu0 0.0
  %63 = vmatprep.subr.mxu0 0.0
  %64 = vmatpush1.xpose.msra.mxu0 0.0
  %65 = vmatprep.subr.mxu0 0.0
  %66 = vmatpush1.xpose.msra.mxu0 0.0
  %67 = vmatprep.subr.mxu0 0.0
  %68 = vmatpush1.xpose.msra.mxu0 0.0
  %69 = vmatprep.subr.mxu0 0.0
  %70 = vmatpush1.xpose.msra.mxu0 0.0
  %71 = vmatprep.subr.mxu0 0.0
  %72 = vmatpush1.xpose.msra.mxu0 0.0
  %73 = vmatprep.subr.mxu0 0.0
  %74 = vmatpush1.xpose.msra.mxu0 0.0
  %75 = vmatprep.subr.mxu0 0.0
  %76 = vmatpush1.xpose.msra.mxu0 0.0
  %77 = vmatprep.subr.mxu0 0.0
  %78 = vmatpush1.xpose.msra.mxu0 0.0
  %79 = vmatprep.subr.mxu0 0.0
  %80 = vmatpush1.xpose.msra.mxu0 0.0
  %81 = vmatprep.subr.mxu0 0.0
  %82 = vmatpush1.xpose.msra.mxu0 0.0
  %83 = vmatprep.subr.mxu0 0.0
  %84 = vmatpush1.xpose.msra.mxu0 0.0
  %85 = vmatprep.subr.mxu0 0.0
  %86 = vmatpush1.xpose.msra.mxu0 0.0
  %87 = vmatprep.subr.mxu0 0.0
  %88 = vmatpush1.xpose.msra.mxu0 0.0
  %89 = vmatprep.subr.mxu0 0.0
  %90 = vmatpush1.xpose.msra.mxu0 0.0
  %91 = vmatprep.subr.mxu0 0.0
  %92 = vmatpush1.xpose.msra.mxu0 0.0
  %93 = vmatprep.subr.mxu0 0.0
  %94 = vmatpush1.xpose.msra.mxu0 0.0
  %95 = vmatprep.subr.mxu0 0.0
  %96 = vmatpush1.xpose.msra.mxu0 0.0
  %97 = vmatprep.subr.mxu0 0.0
  %98 = vmatpush1.xpose.msra.mxu0 0.0
  %99 = vmatprep.subr.mxu0 0.0
  %100 = vmatpush1.xpose.msra.mxu0 0.0
  %101 = vmatprep.mubr.f32.mxu0 0.0
  %102 = vmatmul.mubr.f32.gmra.mrb[0].mxu0 %v32
  %v103 = vpop.f32.mrb[0].mxu0
  %v104 = vadd.f32 0.0, %v103
  %v105 = vpop.f32.mrb[0].mxu0
  %106 = vdwg.mxu0
  %108 = vset.pattern.permute.xlu0 0
  %109 = vperm.xlu0 %108, %v25
  %v110 = vpop.permute.xlu0 %109
  %v113 = vlaneseq
  %v114 = vshrl.u32 %v113, 7
  %v115 = vsub.s32 0, %v114
  %v116 = vrot.slane %v23, %v115
  %v118 = vadd.f32 %v110, %v116
  %v119 = vmul.f32 %v104, 2.0
  %v120 = vsub.f32 %v118, %v119
  %v121 = vmax.f32 %v120, 1e-12
  %v122 = vrsqrt.pop %v121
  %v123 = vmul.f32 %v121, %v122
  %vm124 = vcmp.eq.f32.partialorder %v121, inf
  %v125 = vsel %vm124, %v121, %v123
  %vm126 = vcmp.eq.f32.partialorder %v121, 0.0
  %v127 = vand.u32 %v121, 2147483648
  %v128 = vsel %vm126, %v127, %v125
  %129 = vset.pattern.permute.xlu0 0
  %130 = vperm.xlu0 %129, %v26
  %v131 = vpop.permute.xlu0 %130
  %v132 = vlaneseq
  %v133 = vshrl.u32 %v132, 7
  %v134 = vsub.s32 0, %v133
  %v135 = vrot.slane %v24, %v134
  %vm136 = vcmp.eq.s32.totalorder %v131, %v135
  %vm137 = vmxor %vm136, 1
  %v138 = vsel %vm136, %v128, 0.0
  %vm139 = vcmask 64512
  %v140 = vsel %vm139, %v138, -inf
  %141 = vmax.xlane.f32.xlu0 %v140
  %v142 = vpop.xlane.xlu0 %141
  %v143 = vsub.f32 %v128, %v142
  %v144 = vsub.f32 0.0, %v128
  %v145 = vsel %vm136, %v143, %v144
  %v146 = vmul.f32 %v145, 1.442695
  %v147 = vpow.pop %v146
  %v148 = vsel %vm136, %v147, 0.0
  %v149 = vsel %vm137, %v147, 0.0
  %v150 = vsel %vm139, %v148, 0.0
  %151 = vadd.xlane.f32.xlu0 %v150
  %v152 = vpop.xlane.xlu0 %151
  %v153 = vadd.f32 %v152, 1e-06
  %v154 = vsel %vm139, %v149, 0.0
  %155 = vadd.xlane.f32.xlu0 %v154
  %v156 = vpop.xlane.xlu0 %155
  %v157 = vadd.f32 %v156, 1e-06
  %v158 = vmul.f32 %v128, %v148
  %v159 = vsel %vm139, %v158, 0.0
  %160 = vadd.xlane.f32.xlu0 %v159
  %v161 = vpop.xlane.xlu0 %160
  %v162 = vrcp.pop %v153
  %v163 = vmul.f32 %v161, %v162
  %v164 = vmul.f32 %v128, %v149
  %v165 = vsel %vm139, %v164, 0.0
  %166 = vadd.xlane.f32.xlu0 %v165
  %v167 = vpop.xlane.xlu0 %166
  %v168 = vrcp.pop %v157
  %v169 = vmul.f32 %v167, %v168
  %v170 = vsub.f32 %v163, %v169
  %v171 = vmax.f32 %v170, 0.0
  %v172 = vand.u32 2147483647, %v170
  %v173 = vsub.f32 0.0, %v172
  %v174 = vmul.f32 %v173, 1.442695
  %v175 = vpow.pop %v174
  %v176 = vadd.f32 %v175, 1.0
  %v177 = vlog2.pop %v176
  %v178 = vmul.f32 %v177, 0.6931472
  %v179 = vadd.f32 %v171, %v178
  %vm180 = vcmask 7168
  %181 = vst.msk [vmem:[%s5] sm:$0xff] %vm180, %v179
  %vm182 = vcmp.ge.f32.partialorder %v169, %v163
  %v183 = vsel %vm182, 1, 0
  %v184 = vcvt.s32.f32 %v183
  %185 = vst.msk [vmem:[%s6] sm:$0xff] %vm180, %v184
  // Predicated region
  $region22: #{tpu_custom_call.1} parent=0 // pred_check
    _
  $region23: #{tpu_custom_call.1} parent=0 // pred_check_branch
    %187 = sbr.rel (0) target = $region25
  $region24: #{tpu_custom_call.1} parent=0 // pred_region
    _
  $region25: #{tpu_custom_call.1} parent=0 // pred_fallthru
    _
  // Predicated region
  $region26: #{tpu_custom_call.1} parent=0 // pred_check
    _
  $region27: #{tpu_custom_call.1} parent=0 // pred_check_branch
    %189 = sbr.rel (0) target = $region29
  $region28: #{tpu_custom_call.1} parent=0 // pred_region
    _
  $region29: #{tpu_custom_call.1} parent=0 // pred_fallthru
    _
  // Predicated region
  $region30: #{tpu_custom_call.1} parent=0 // pred_check
    _
  $region31: #{tpu_custom_call.1} parent=0 // pred_check_branch
    %191 = sbr.rel (0) target = $region33
  $region32: #{tpu_custom_call.1} parent=0 // pred_region
    _
  $region33: #{tpu_custom_call.1} parent=0 // pred_fallthru
    _
  // Predicated region
  $region34: #{tpu_custom_call.1} parent=0 // pred_check
    _
  $region35: #{tpu_custom_call.1} parent=0 // pred_check_branch
    %193 = sbr.rel (0) target = $region37
  $region36: #{tpu_custom_call.1} parent=0 // pred_region
    _
  $region37: #{tpu_custom_call.1} parent=0 // pred_fallthru
    _

// kernel: tpu_custom_call.1
$region0: #{tpu_custom_call.1}
  #allocation0 [shape = 'u32[]', space=smem, size = 0x4, offset = 0x4, fixed_abs, tag = 'smem constant byte address 0x4 - core index']
  #allocation1 [shape = 'u32[144,128]{1,0:T(1,128)}', space=vmem, size = 0x12000, scoped, tag = 'internal scratch']
  %s0 = inlined_call_operand.vmem [shape: f32[8,32], index: 0, kind: input, shape index: {}]
  %s1 = inlined_call_operand.vmem [shape: f32[1,8], index: 1, kind: input, shape index: {}]
  %s2 = inlined_call_operand.vmem [shape: s32[1,8], index: 2, kind: input, shape index: {}]
  %s3 = inlined_call_operand.vmem [shape: f32[8,1], index: 3, kind: input, shape index: {}]
  %s4 = inlined_call_operand.vmem [shape: s32[8,1], index: 4, kind: input, shape index: {}]
  %s5 = inlined_call_operand.vmem [shape: f32[8,1], index: 5, kind: output, shape index: {0}]
  %s6 = inlined_call_operand.vmem [shape: f32[8,1], index: 6, kind: output, shape index: {1}]
  %7 = xla_tuple %s5, %s6
  %s8 = sld [smem:[#allocation0]]
  $region38: #{tpu_custom_call.1} parent=0
    _
  %s10 = ssub.s32 1, %s8
  %s11 = scalar_select 0, %s10, %s8
  // Predicated region
  $region2: #{tpu_custom_call.1} parent=0 // pred_check
    _
  $region3: #{tpu_custom_call.1} parent=0 // pred_check_branch
    %13 = sbr.rel (0) target = $region5
  $region4: #{tpu_custom_call.1} parent=0 // pred_region
    _
  $region5: #{tpu_custom_call.1} parent=0 // pred_fallthru
    _
  // Predicated region
  $region6: #{tpu_custom_call.1} parent=0 // pred_check
    _
  $region7: #{tpu_custom_call.1} parent=0 // pred_check_branch
    %15 = sbr.rel (0) target = $region9
  $region8: #{tpu_custom_call.1} parent=0 // pred_region
    _
  $region9: #{tpu_custom_call.1} parent=0 // pred_fallthru
    _
  // Predicated region
  $region10: #{tpu_custom_call.1} parent=0 // pred_check
    _
  $region11: #{tpu_custom_call.1} parent=0 // pred_check_branch
    %17 = sbr.rel (0) target = $region13
  $region12: #{tpu_custom_call.1} parent=0 // pred_region
    _
  $region13: #{tpu_custom_call.1} parent=0 // pred_fallthru
    _
  // Predicated region
  $region14: #{tpu_custom_call.1} parent=0 // pred_check
    _
  $region15: #{tpu_custom_call.1} parent=0 // pred_check_branch
    %19 = sbr.rel (0) target = $region17
  $region16: #{tpu_custom_call.1} parent=0 // pred_region
    _
  $region17: #{tpu_custom_call.1} parent=0 // pred_fallthru
    _
  // Predicated region
  $region18: #{tpu_custom_call.1} parent=0 // pred_check
    _
  $region19: #{tpu_custom_call.1} parent=0 // pred_check_branch
    %21 = sbr.rel (0) target = $region21
  $region20: #{tpu_custom_call.1} parent=0 // pred_region
    _
  $region21: #{tpu_custom_call.1} parent=0 // pred_fallthru
    _
  %v22 = vld [vmem:[%s0] sm:$0xff]
  %v23 = vld [vmem:[%s1] sm:$0x1]
  %v24 = vld [vmem:[%s2] sm:$0x1]
  %v25 = vld [vmem:[%s3] sm:$0xff]
  %v26 = vld [vmem:[%s4] sm:$0xff]
  %s27 = smul.u32 0, 8
  %s28 = scalar_lea.vmem %s0, %s27
  %v29 = vld [vmem:[%s28] sm:$0xff]
  %vm30 = vcmask 261120
  %v32 = vsel %vm30, %v29, 0
  %v35 = vsel %vm30, %v22, 0
  %37 = vmatprep.subr.mxu0 0.0
  %38 = vmatpush1.xpose.msra.mxu0 %v35
  %39 = vmatprep.subr.mxu0 0.0
  %40 = vmatpush1.xpose.msra.mxu0 0.0
  %41 = vmatprep.subr.mxu0 0.0
  %42 = vmatpush1.xpose.msra.mxu0 0.0
  %43 = vmatprep.subr.mxu0 0.0
  %44 = vmatpush1.xpose.msra.mxu0 0.0
  %45 = vmatprep.subr.mxu0 0.0
  %46 = vmatpush1.xpose.msra.mxu0 0.0
  %47 = vmatprep.subr.mxu0 0.0
  %48 = vmatpush1.xpose.msra.mxu0 0.0
  %49 = vmatprep.subr.mxu0 0.0
  %50 = vmatpush1.xpose.msra.mxu0 0.0
  %51 = vmatprep.subr.mxu0 0.0
  %52 = vmatpush1.xpose.msra.mxu0 0.0
  %53 = vmatprep.subr.mxu0 0.0
  %54 = vmatpush1.xpose.msra.mxu0 0.0
  %55 = vmatprep.subr.mxu0 0.0
  %56 = vmatpush1.xpose.msra.mxu0 0.0
  %57 = vmatprep.subr.mxu0 0.0
  %58 = vmatpush1.xpose.msra.mxu0 0.0
  %59 = vmatprep.subr.mxu0 0.0
  %60 = vmatpush1.xpose.msra.mxu0 0.0
  %61 = vmatprep.subr.mxu0 0.0
  %62 = vmatpush1.xpose.msra.mxu0 0.0
  %63 = vmatprep.subr.mxu0 0.0
  %64 = vmatpush1.xpose.msra.mxu0 0.0
  %65 = vmatprep.subr.mxu0 0.0
  %66 = vmatpush1.xpose.msra.mxu0 0.0
  %67 = vmatprep.subr.mxu0 0.0
  %68 = vmatpush1.xpose.msra.mxu0 0.0
  %69 = vmatprep.subr.mxu0 0.0
  %70 = vmatpush1.xpose.msra.mxu0 0.0
  %71 = vmatprep.subr.mxu0 0.0
  %72 = vmatpush1.xpose.msra.mxu0 0.0
  %73 = vmatprep.subr.mxu0 0.0
  %74 = vmatpush1.xpose.msra.mxu0 0.0
  %75 = vmatprep.subr.mxu0 0.0
  %76 = vmatpush1.xpose.msra.mxu0 0.0
  %77 = vmatprep.subr.mxu0 0.0
  %78 = vmatpush1.xpose.msra.mxu0 0.0
  %79 = vmatprep.subr.mxu0 0.0
  %80 = vmatpush1.xpose.msra.mxu0 0.0
  %81 = vmatprep.subr.mxu0 0.0
  %82 = vmatpush1.xpose.msra.mxu0 0.0
  %83 = vmatprep.subr.mxu0 0.0
  %84 = vmatpush1.xpose.msra.mxu0 0.0
  %85 = vmatprep.subr.mxu0 0.0
  %86 = vmatpush1.xpose.msra.mxu0 0.0
  %87 = vmatprep.subr.mxu0 0.0
  %88 = vmatpush1.xpose.msra.mxu0 0.0
  %89 = vmatprep.subr.mxu0 0.0
  %90 = vmatpush1.xpose.msra.mxu0 0.0
  %91 = vmatprep.subr.mxu0 0.0
  %92 = vmatpush1.xpose.msra.mxu0 0.0
  %93 = vmatprep.subr.mxu0 0.0
  %94 = vmatpush1.xpose.msra.mxu0 0.0
  %95 = vmatprep.subr.mxu0 0.0
  %96 = vmatpush1.xpose.msra.mxu0 0.0
  %97 = vmatprep.subr.mxu0 0.0
  %98 = vmatpush1.xpose.msra.mxu0 0.0
  %99 = vmatprep.subr.mxu0 0.0
  %100 = vmatpush1.xpose.msra.mxu0 0.0
  %101 = vmatprep.mubr.f32.mxu0 0.0
  %102 = vmatmul.mubr.f32.gmra.mrb[0].mxu0 %v32
  %v103 = vpop.f32.mrb[0].mxu0
  %v104 = vadd.f32 0.0, %v103
  %v105 = vpop.f32.mrb[0].mxu0
  %106 = vdwg.mxu0
  %108 = vset.pattern.permute.xlu0 0
  %109 = vperm.xlu0 %108, %v25
  %v110 = vpop.permute.xlu0 %109
  %v113 = vlaneseq
  %v114 = vshrl.u32 %v113, 7
  %v115 = vsub.s32 0, %v114
  %v116 = vrot.slane %v23, %v115
  %v118 = vadd.f32 %v110, %v116
  %v119 = vmul.f32 %v104, 2.0
  %v120 = vsub.f32 %v118, %v119
  %v121 = vmax.f32 %v120, 1e-12
  %v122 = vrsqrt.pop %v121
  %v123 = vmul.f32 %v121, %v122
  %vm124 = vcmp.eq.f32.partialorder %v121, inf
  %v125 = vsel %vm124, %v121, %v123
  %vm126 = vcmp.eq.f32.partialorder %v121, 0.0
  %v127 = vand.u32 %v121, 2147483648
  %v128 = vsel %vm126, %v127, %v125
  %129 = vset.pattern.permute.xlu0 0
  %130 = vperm.xlu0 %129, %v26
  %v131 = vpop.permute.xlu0 %130
  %v132 = vlaneseq
  %v133 = vshrl.u32 %v132, 7
  %v134 = vsub.s32 0, %v133
  %v135 = vrot.slane %v24, %v134
  %vm136 = vcmp.eq.s32.totalorder %v131, %v135
  %vm137 = vmxor %vm136, 1
  %v138 = vsel %vm136, %v128, 0.0
  %vm139 = vcmask 64512
  %v140 = vsel %vm139, %v138, -inf
  %141 = vmax.xlane.f32.xlu0 %v140
  %v142 = vpop.xlane.xlu0 %141
  %v143 = vsub.f32 %v128, %v142
  %v144 = vsub.f32 0.0, %v128
  %v145 = vsel %vm136, %v143, %v144
  %v146 = vmul.f32 %v145, 1.442695
  %v147 = vpow.pop %v146
  %v148 = vsel %vm136, %v147, 0.0
  %v149 = vsel %vm137, %v147, 0.0
  %v150 = vsel %vm139, %v148, 0.0
  %151 = vadd.xlane.f32.xlu0 %v150
  %v152 = vpop.xlane.xlu0 %151
  %v153 = vadd.f32 %v152, 1e-06
  %v154 = vsel %vm139, %v149, 0.0
  %155 = vadd.xlane.f32.xlu0 %v154
  %v156 = vpop.xlane.xlu0 %155
  %v157 = vadd.f32 %v156, 1e-06
  %v158 = vmul.f32 %v128, %v148
  %v159 = vsel %vm139, %v158, 0.0
  %160 = vadd.xlane.f32.xlu0 %v159
  %v161 = vpop.xlane.xlu0 %160
  %v162 = vrcp.pop %v153
  %v163 = vmul.f32 %v161, %v162
  %v164 = vmul.f32 %v128, %v149
  %v165 = vsel %vm139, %v164, 0.0
  %166 = vadd.xlane.f32.xlu0 %v165
  %v167 = vpop.xlane.xlu0 %166
  %v168 = vrcp.pop %v157
  %v169 = vmul.f32 %v167, %v168
  %v170 = vsub.f32 %v163, %v169
  %v171 = vmax.f32 %v170, 0.0
  %v172 = vand.u32 2147483647, %v170
  %v173 = vsub.f32 0.0, %v172
  %v174 = vmul.f32 %v173, 1.442695
  %v175 = vpow.pop %v174
  %v176 = vadd.f32 %v175, 1.0
  %v177 = vlog2.pop %v176
  %v178 = vmul.f32 %v177, 0.6931472
  %v179 = vadd.f32 %v171, %v178
  %vm180 = vcmask 7168
  %181 = vst.msk [vmem:[%s5] sm:$0xff] %vm180, %v179
  %vm182 = vcmp.ge.f32.partialorder %v169, %v163
  %v183 = vsel %vm182, 1, 0
  %v184 = vcvt.s32.f32 %v183
  %185 = vst.msk [vmem:[%s6] sm:$0xff] %vm180, %v184
  // Predicated region
  $region22: #{tpu_custom_call.1} parent=0 // pred_check
    _
  $region23: #{tpu_custom_call.1} parent=0 // pred_check_branch
    %187 = sbr.rel (0) target = $region25
  $region24: #{tpu_custom_call.1} parent=0 // pred_region
    _
  $region25: #{tpu_custom_call.1} parent=0 // pred_fallthru
    _
  // Predicated region
  $region26: #{tpu_custom_call.1} parent=0 // pred_check
    _
  $region27: #{tpu_custom_call.1} parent=0 // pred_check_branch
    %189 = sbr.rel (0) target = $region29
  $region28: #{tpu_custom_call.1} parent=0 // pred_region
    _
  $region29: #{tpu_custom_call.1} parent=0 // pred_fallthru
    _
  // Predicated region
  $region30: #{tpu_custom_call.1} parent=0 // pred_check
    _
  $region31: #{tpu_custom_call.1} parent=0 // pred_check_branch
    %191 = sbr.rel (0) target = $region33
  $region32: #{tpu_custom_call.1} parent=0 // pred_region
    _
  $region33: #{tpu_custom_call.1} parent=0 // pred_fallthru
    _
  // Predicated region
  $region34: #{tpu_custom_call.1} parent=0 // pred_check
    _
  $region35: #{tpu_custom_call.1} parent=0 // pred_check_branch
    %193 = sbr.rel (0) target = $region37
  $region36: #{tpu_custom_call.1} parent=0 // pred_region
    _
  $region37: #{tpu_custom_call.1} parent=0 // pred_fallthru
    _

</llo_original>
